<compile_context>
chip_gen: v7x
topology: tpu7x:2x2x1
jax: 0.10.0
libtpu: 0.0.40
codegen_flags: <defaults>
</compile_context>

<pallas_src>
import math

import jax
import jax.numpy as jnp
from jax import lax
from jax.experimental import pallas as pl
from jax.experimental.pallas import tpu as pltpu


# ----------------------------------------------------------------------------
# Tiling / VMEM helpers
# ----------------------------------------------------------------------------
def _pick_tile(dim, pref, align=1):
    """Largest divisor of `dim` that is <= pref and a multiple of `align`.

    Falls back to the full dimension (always legal for a BlockSpec) only when no
    such divisor exists."""
    if dim <= pref:
        return dim
    for t in range(pref, 0, -1):
        if dim % t == 0 and t % align == 0:
            return t
    return dim


def _heads_per_block(n_heads, head_dim):
    """Smallest head-group whose width (hb * head_dim) is lane-dense (mult of 128)."""
    for hb in range(1, n_heads + 1):
        if n_heads % hb == 0 and (hb * head_dim) % 128 == 0:
            return hb
    # emb_dim not a multiple of 128: take the whole E axis (block == full dim).
    # TODO(synk): for very large n_heads with tiny head_dim this unroll should
    # become a lax.fori_loop to bound code size / vreg pressure.
    return n_heads


def _vmem_capacity_bytes():
    try:
        return int(pltpu.get_tpu_info().vmem_capacity_bytes)
    except Exception:
        return 64 << 20  # conservative (v7x per-TensorCore)


def _vmem_limit_bytes(block_bytes, scratch_bytes=0):
    """Double-buffered pipeline blocks + scratch + headroom, capped at 75% of VMEM."""
    cap = int(0.75 * _vmem_capacity_bytes())
    need = 2 * sum(block_bytes) + scratch_bytes + (4 << 20)
    return int(min(max(need, 32 << 20), cap))


# ----------------------------------------------------------------------------
# Linear projection: y = x @ Wt   (x: [M, K], Wt: [K, N] -- pre-transposed weight)
# ----------------------------------------------------------------------------
def _linear_kernel(x_ref, w_ref, o_ref, acc_ref):
    @pl.when(pl.program_id(2) == 0)
    def _():
        acc_ref[...] = jnp.zeros_like(acc_ref)

    # Canonical MXU contraction (last dim of x with first dim of Wt); no transpose.
    acc_ref[...] += jnp.dot(x_ref[...], w_ref[...],
                            preferred_element_type=jnp.float32)

    @pl.when(pl.program_id(2) == pl.num_programs(2) - 1)
    def _():
        o_ref[...] = acc_ref[...].astype(o_ref.dtype)


def linear_nt(x, wt):
    """x: [M, K], wt: [K, N] (already transposed from nn.Linear's [N, K])."""
    M, K = x.shape
    K2, N = wt.shape
    assert K == K2
    itm = jnp.dtype(x.dtype).itemsize
    tk_pref = 1024 if itm <= 2 else 512
    tm = _pick_tile(M, 512, align=8)
    tn = _pick_tile(N, 512, align=128)
    tk = _pick_tile(K, tk_pref, align=128)

    limit = _vmem_limit_bytes(
        [tm * tk * itm, tk * tn * itm, tm * tn * itm],
        scratch_bytes=tm * tn * 4)

    return pl.pallas_call(
        _linear_kernel,
        out_shape=jax.ShapeDtypeStruct((M, N), x.dtype),
        grid=(M // tm, N // tn, K // tk),
        in_specs=[
            pl.BlockSpec((tm, tk), lambda i, j, k: (i, k)),
            pl.BlockSpec((tk, tn), lambda i, j, k: (k, j)),
        ],
        out_specs=pl.BlockSpec((tm, tn), lambda i, j, k: (i, j)),
        scratch_shapes=[pltpu.VMEM((tm, tn), jnp.float32)],
        compiler_params=pltpu.CompilerParams(
            dimension_semantics=("parallel", "parallel", "arbitrary"),
            vmem_limit_bytes=limit),
    )(x, wt)


# ----------------------------------------------------------------------------
# Attention over [B, S, E] slabs.  Grid: (batch, head-block, q-tile, kv-tile);
# heads are static Dh-wide slices of the E axis inside the block; flash-style
# online softmax accumulated over the kv grid axis (no (S,S) score slab).
# ----------------------------------------------------------------------------
def _lane_bcast(col128, n):
    """col128: (tq, 128) lane-replicated values -> (tq, n)."""
    if n <= 128:
        return col128[:, :n]
    return jnp.broadcast_to(col128[:, :1], (col128.shape[0], n))


def _make_attention_kernel(heads_per_block, head_dim):
    width = heads_per_block * head_dim

    def kernel(q_ref, k_ref, v_ref, bias_ref, o_ref, m_ref, l_ref, acc_ref):
        kvi = pl.program_id(3)

        @pl.when(kvi == 0)
        def _():
            m_ref[...] = jnp.full_like(m_ref, -jnp.inf)
            l_ref[...] = jnp.zeros_like(l_ref)
            acc_ref[...] = jnp.zeros_like(acc_ref)

        q_blk = q_ref[0]          # (tq,  width), input dtype; 1/sqrt(Dh) folded into w_q
        k_blk = k_ref[0]          # (tkv, width)
        v_blk = v_ref[0]          # (tkv, width)
        key_bias = bias_ref[0, 0]  # (tkv,) f32 additive bias (0 or -1e30), host-built

        tq = q_blk.shape[0]
        alpha_parts = []
        pv_parts = []
        for h in range(heads_per_block):      # unrolled; heads_per_block is small
            lo = h * head_dim
            hi = lo + head_dim
            qh = q_blk[:, lo:hi]
            kh = k_blk[:, lo:hi]
            vh = v_blk[:, lo:hi]

            # scores = qh @ kh.T, contracting last dims (no transpose materialized).
            s = lax.dot_general(
                qh, kh, dimension_numbers=(((1,), (1,)), ((), ())),
                preferred_element_type=jnp.float32)
            s = s + key_bias[None, :]

            # Online softmax; m/l are (tq, 128) lane-replicated -> full-lane stores.
            m_prev = m_ref[h]
            s_max = jnp.max(s, axis=-1, keepdims=True)          # (tq, 1)
            m_new = jnp.maximum(m_prev, s_max)                   # (tq, 128)
            alpha = jnp.exp(m_prev - m_new)                      # (tq, 128)
            p = jnp.exp(s - m_new[:, :1])                        # (tq, tkv)
            l_ref[h] = alpha * l_ref[h] + jnp.sum(p, axis=-1, keepdims=True)
            m_ref[h] = m_new

            pv = lax.dot_general(
                p.astype(vh.dtype), vh,
                dimension_numbers=(((1,), (0,)), ((), ())),
                preferred_element_type=jnp.float32)              # (tq, Dh)
            pv_parts.append(pv)
            alpha_parts.append(_lane_bcast(alpha, head_dim))

        if heads_per_block == 1:
            alpha_full, pv_full = alpha_parts[0], pv_parts[0]
        else:
            alpha_full = jnp.concatenate(alpha_parts, axis=-1)   # (tq, width)
            pv_full = jnp.concatenate(pv_parts, axis=-1)         # (tq, width)
        # Single full-width accumulator RMW (no per-head sub-128-lane stores).
        acc_ref[...] = alpha_full * acc_ref[...] + pv_full

        # TODO(synk): training-mode dropout on the attention probabilities is not
        # implemented (matches eval mode / dropout p == 0.0).

        @pl.when(kvi == pl.num_programs(3) - 1)
        def _():
            inv_parts = []
            for h in range(heads_per_block):
                inv = pl.reciprocal(l_ref[h], approx=True)       # EUP slot, ~free
                inv_parts.append(_lane_bcast(inv, head_dim))
            inv_full = (inv_parts[0] if heads_per_block == 1
                        else jnp.concatenate(inv_parts, axis=-1))
            o_ref[0] = (acc_ref[...] * inv_full).astype(o_ref.dtype)  # one full-width store

    return kernel, width


def attention(qp, kp, vp, key_bias, n_heads, *, tq_pref=512, tkv_pref=512):
    """qp/kp/vp: projected [B, S, E]; key_bias: [B, 1, S] f32 additive mask bias."""
    B, S, E = qp.shape
    assert E % n_heads == 0
    head_dim = E // n_heads
    hb = _heads_per_block(n_heads, head_dim)
    n_hblk = n_heads // hb

    tq = _pick_tile(S, tq_pref, align=8)
    tkv = _pick_tile(S, tkv_pref, align=128)

    # Keep >= 2 parallel grid iterations so both v7x TensorCores get work.
    while (B * n_hblk * (S // tq) < 2 and tq % 2 == 0
           and (tq // 2) % 8 == 0 and S % (tq // 2) == 0):
        tq //= 2

    kernel, width = _make_attention_kernel(hb, head_dim)

    itm = jnp.dtype(qp.dtype).itemsize
    limit = _vmem_limit_bytes(
        [tq * width * itm,            # q block
         2 * tkv * width * itm,       # k + v blocks
         tq * width * itm,            # out block
         tkv * 4],                    # bias block
        scratch_bytes=(2 * hb * tq * 128 + tq * width) * 4)

    return pl.pallas_call(
        kernel,
        out_shape=jax.ShapeDtypeStruct((B, S, E), qp.dtype),
        grid=(B, n_hblk, S // tq, S // tkv),
        in_specs=[
            pl.BlockSpec((1, tq, width), lambda b, h, qi, ki: (b, qi, h)),
            pl.BlockSpec((1, tkv, width), lambda b, h, qi, ki: (b, ki, h)),
            pl.BlockSpec((1, tkv, width), lambda b, h, qi, ki: (b, ki, h)),
            pl.BlockSpec((1, 1, tkv), lambda b, h, qi, ki: (b, 0, ki)),
        ],
        out_specs=pl.BlockSpec((1, tq, width), lambda b, h, qi, ki: (b, qi, h)),
        scratch_shapes=[
            pltpu.VMEM((hb, tq, 128), jnp.float32),   # running max (lane-replicated)
            pltpu.VMEM((hb, tq, 128), jnp.float32),   # running denom (lane-replicated)
            pltpu.VMEM((tq, width), jnp.float32),     # output accumulator
        ],
        compiler_params=pltpu.CompilerParams(
            dimension_semantics=("parallel", "parallel", "parallel", "arbitrary"),
            vmem_limit_bytes=limit),
    )(qp, kp, vp, key_bias)


# ----------------------------------------------------------------------------
# Full MultiHeadAttention forward (returns x, matching the module's forward()).
# ----------------------------------------------------------------------------
def multi_head_attention(q, k, v, mask, w_q, w_k, w_v, w_o, n_heads):
    B, S, E = q.shape
    head_dim = E // n_heads
    scale = 1.0 / math.sqrt(head_dim)

    # Mask -> additive f32 bias on the host (0 keep / -1e30 masked).  Note:
    # fully-masked rows give a uniform softmax (mean of V) instead of NaN.
    if mask is None:
        key_bias = jnp.zeros((B, 1, S), jnp.float32)
    else:
        key_bias = jnp.where(mask == 0, jnp.float32(-1e30),
                             jnp.float32(0.0)).reshape(B, 1, S)

    q2 = q.reshape(B * S, E)

    if (q is k) and (k is v):
        # Self-attention: fused QKV projection -> x streamed from HBM once.
        w_qkv_t = jnp.concatenate([w_q * scale, w_k, w_v], axis=0).T   # [E, 3E]
        qkv = linear_nt(q2, w_qkv_t)                                   # [B*S, 3E]
        qp = qkv[:, :E].reshape(B, S, E)
        kp = qkv[:, E:2 * E].reshape(B, S, E)
        vp = qkv[:, 2 * E:].reshape(B, S, E)
    else:
        qp = linear_nt(q2, (w_q * scale).T).reshape(B, S, E)
        kp = linear_nt(k.reshape(B * S, E), w_k.T).reshape(B, S, E)
        vp = linear_nt(v.reshape(B * S, E), w_v.T).reshape(B, S, E)

    # Head split/merge happens inside the attention BlockSpecs on the [B, S, E]
    # layout: no reshape/transpose HBM round trips.
    x = attention(qp, kp, vp, key_bias, n_heads)

    # TODO(synk): the [B, H, S, S] attention-probability tensor (self.attn_scores
    # in the PyTorch module) is intentionally not materialized to avoid the
    # O(B*H*S^2) HBM writeback; forward() only returns x.
    return linear_nt(x.reshape(B * S, E), w_o.T).reshape(B, S, E)


# ----------------------------------------------------------------------------
# Pure-JAX reference (same semantics) for a sanity check.
# ----------------------------------------------------------------------------
def _reference(q, k, v, mask, w_q, w_k, w_v, w_o, n_heads):
    B, S, E = q.shape
    Dh = E // n_heads
    qp = (q @ w_q.T).reshape(B, S, n_heads, Dh).transpose(0, 2, 1, 3)
    kp = (k @ w_k.T).reshape(B, S, n_heads, Dh).transpose(0, 2, 1, 3)
    vp = (v @ w_v.T).reshape(B, S, n_heads, Dh).transpose(0, 2, 1, 3)
    scores = jnp.einsum("bhqd,bhkd->bhqk", qp, kp) / math.sqrt(Dh)
    scores = jnp.where(mask[:, None, None, :] == 0, -jnp.inf, scores)
    probs = jax.nn.softmax(scores, axis=-1)
    out = jnp.einsum("bhqk,bhkd->bhqd", probs, vp)
    out = out.transpose(0, 2, 1, 3).reshape(B, S, E)
    return out @ w_o.T


if __name__ == "__main__":
    B, S, E, H = 2, 8, 32, 4  # batch, seq_len, emb_dim, n_heads
    key = jax.random.PRNGKey(0)
    kq, kk, kv, kwq, kwk, kwv, kwo, km = jax.random.split(key, 8)

    q_in = jax.random.normal(kq, (B, S, E), jnp.float32)
    k_in = jax.random.normal(kk, (B, S, E), jnp.float32)
    v_in = jax.random.normal(kv, (B, S, E), jnp.float32)

    # Deterministic "nn.Linear"-style init: U(-1/sqrt(fan_in), 1/sqrt(fan_in)).
    bound = 1.0 / math.sqrt(E)
    w_q = jax.random.uniform(kwq, (E, E), jnp.float32, -bound, bound)
    w_k = jax.random.uniform(kwk, (E, E), jnp.float32, -bound, bound)
    w_v = jax.random.uniform(kwv, (E, E), jnp.float32, -bound, bound)
    w_o = jax.random.uniform(kwo, (E, E), jnp.float32, -bound, bound)

    # Padding-style mask [batch, seq_len]: 1 = keep, 0 = masked key position.
    mask = (jax.random.uniform(km, (B, S)) > 0.2).astype(jnp.int32)
    mask = mask.at[:, 0].set(1)  # ensure at least one valid key per row

    # Cross-attention path (distinct q/k/v -> three projection calls).
    out = multi_head_attention(q_in, k_in, v_in, mask, w_q, w_k, w_v, w_o, H)
    out = jax.block_until_ready(out)
    ref = _reference(q_in, k_in, v_in, mask, w_q, w_k, w_v, w_o, H)
    assert out.shape == (B, S, E)
    # Slightly loose tolerance because of the approx (EUP) reciprocal in the
    # softmax normalization and the scale folded into w_q.
    assert jnp.allclose(out, ref, rtol=2e-3, atol=2e-3)

    # Self-attention path (q is k is v -> fused QKV projection kernel).
    out_sa = multi_head_attention(q_in, q_in, q_in, mask, w_q, w_k, w_v, w_o, H)
    out_sa = jax.block_until_ready(out_sa)
    ref_sa = _reference(q_in, q_in, q_in, mask, w_q, w_k, w_v, w_o, H)
    assert jnp.allclose(out_sa, ref_sa, rtol=2e-3, atol=2e-3)

    print("KERNEL_OK")
</pallas_src>

<mosaic_0001>
module attributes {stable_mosaic.version = 11 : i64} {
  func.func @_linear_kernel(%arg0: i32, %arg1: i32, %arg2: i32, %arg3: memref<16x32xf32, #tpu.memory_space<vmem>>, %arg4: memref<32x32xf32, #tpu.memory_space<vmem>>, %arg5: memref<16x32xf32, #tpu.memory_space<vmem>>, %arg6: memref<16x32xf32, #tpu.memory_space<vmem>>) attributes {dimension_semantics = [#tpu.dimension_semantics<parallel>, #tpu.dimension_semantics<parallel>, #tpu.dimension_semantics<arbitrary>], iteration_bounds = array<i64: 1, 1, 1>, scalar_prefetch = 0 : i64, scratch_operands = 1 : i64, tpu.core_type = #tpu.core_type<tc>, window_params = [{transform_indices = @transform_0, window_bounds = array<i64: 16, 32>}, {transform_indices = @transform_1, window_bounds = array<i64: 32, 32>}, {transform_indices = @transform_2, window_bounds = array<i64: 16, 32>}]} {
    %c0_i32 = arith.constant 0 : i32
    %0 = arith.cmpi eq, %arg2, %c0_i32 : i32
    %1 = arith.extui %0 : i1 to i32
    %c0_i32_0 = arith.constant 0 : i32
    %2 = arith.cmpi ne, %1, %c0_i32_0 : i32
    scf.if %2 {
      %cst_10 = arith.constant 0.000000e+00 : f32
      %12 = vector.broadcast %cst_10 : f32 to vector<16x32xf32>
      %c0_11 = arith.constant 0 : index
      %c0_12 = arith.constant 0 : index
      %13 = vector.load %arg6[%c0_11, %c0_12] : memref<16x32xf32, #tpu.memory_space<vmem>>, vector<16x32xf32>
      tpu.vector_store %arg6[%c0_11, %c0_12], %12 {strides = array<i32>} : memref<16x32xf32, #tpu.memory_space<vmem>>, vector<16x32xf32>,
    } else {
    }
    %c0 = arith.constant 0 : index
    %c0_1 = arith.constant 0 : index
    %3 = vector.load %arg6[%c0, %c0_1] : memref<16x32xf32, #tpu.memory_space<vmem>>, vector<16x32xf32>
    %c0_2 = arith.constant 0 : index
    %c0_3 = arith.constant 0 : index
    %4 = vector.load %arg3[%c0_2, %c0_3] : memref<16x32xf32, #tpu.memory_space<vmem>>, vector<16x32xf32>
    %c0_4 = arith.constant 0 : index
    %c0_5 = arith.constant 0 : index
    %5 = vector.load %arg4[%c0_4, %c0_5] : memref<32x32xf32, #tpu.memory_space<vmem>>, vector<32x32xf32>
    %cst = arith.constant dense<0.000000e+00> : vector<16x32xf32>
    %6 = tpu.matmul %4, %5, %cst {dimension_numbers = #tpu.dot_dimension_numbers<[1], [0], [0], [1], [0, 0, 1, 1], [], []>} : vector<16x32xf32>, vector<32x32xf32>, vector<16x32xf32> -> vector<16x32xf32>
    %7 = arith.addf %3, %6 : vector<16x32xf32>
    %c0_6 = arith.constant 0 : index
    %c0_7 = arith.constant 0 : index
    %8 = vector.load %arg6[%c0_6, %c0_7] : memref<16x32xf32, #tpu.memory_space<vmem>>, vector<16x32xf32>
    tpu.vector_store %arg6[%c0_6, %c0_7], %7 {strides = array<i32>} : memref<16x32xf32, #tpu.memory_space<vmem>>, vector<16x32xf32>,
    %c0_i32_8 = arith.constant 0 : i32
    %9 = arith.cmpi eq, %arg2, %c0_i32_8 : i32
    %10 = arith.extui %9 : i1 to i32
    %c0_i32_9 = arith.constant 0 : i32
    %11 = arith.cmpi ne, %10, %c0_i32_9 : i32
    scf.if %11 {
      %c0_10 = arith.constant 0 : index
      %c0_11 = arith.constant 0 : index
      %12 = vector.load %arg6[%c0_10, %c0_11] : memref<16x32xf32, #tpu.memory_space<vmem>>, vector<16x32xf32>
      %c0_12 = arith.constant 0 : index
      %c0_13 = arith.constant 0 : index
      %13 = vector.load %arg5[%c0_12, %c0_13] : memref<16x32xf32, #tpu.memory_space<vmem>>, vector<16x32xf32>
      tpu.vector_store %arg5[%c0_12, %c0_13], %12 {strides = array<i32>} : memref<16x32xf32, #tpu.memory_space<vmem>>, vector<16x32xf32>,
    } else {
    }
    return
  }
  func.func @transform_0(%arg0: i32, %arg1: i32, %arg2: i32) -> (i32, i32) {
    %c0_i32 = arith.constant 0 : i32
    return %arg0, %arg2 : i32, i32
  }
  func.func @transform_1(%arg0: i32, %arg1: i32, %arg2: i32) -> (i32, i32) {
    %c0_i32 = arith.constant 0 : i32
    return %arg2, %arg1 : i32, i32
  }
  func.func @transform_2(%arg0: i32, %arg1: i32, %arg2: i32) -> (i32, i32) {
    %c0_i32 = arith.constant 0 : i32
    return %arg0, %arg1 : i32, i32
  }
}

</mosaic_0001>

<llo_original>
// kernel: tpu_custom_call.1
$region0: #{tpu_custom_call.1}
  #allocation0 [shape = 'u32[]', space=smem, size = 0x4, offset = 0x4, fixed_abs, tag = 'smem constant byte address 0x4 - core index']
  #allocation1 [shape = 'u32[144,128]{1,0:T(1,128)}', space=vmem, size = 0x12000, scoped, tag = 'internal scratch']
  #allocation2 [shape = 'f32[16,32]{1,0:T(8,128)}', space=vmem, size = 0x2000, scoped, tag = 'scratch operand']
  %s0 = inlined_call_operand.hbm [shape: f32[16,32], index: 0, kind: input, shape index: {}]
  %s1 = inlined_call_operand.hbm [shape: f32[32,32], index: 1, kind: input, shape index: {}]
  %s2 = inlined_call_operand.hbm [shape: f32[16,32], index: 2, kind: output, shape index: {}]
  %s3 = sld [smem:[#allocation0]]
  $region34: #{tpu_custom_call.1} parent=0
    _
  %s5 = ssub.s32 1, %s3
  %s6 = scalar_select 0, %s5, %s3
  $region1: #{tpu_custom_call.1} parent=0
    #allocation3 [shape = 'u8[8192]{0}', space=vmem, size = 0x2000, scoped, tag = 'input window, operand 0, single buffered']
    #allocation4 [shape = 's32[1]{0}', space=sflag, size = 0x4, scoped, tag = 'scoped memory for tpu_custom_call.1']
    #allocation5 [shape = 's32[1]{0}', space=sflag, size = 0x4, scoped, tag = 'scoped memory for tpu_custom_call.1']
    #allocation6 [shape = 'u8[16384]{0}', space=vmem, size = 0x4000, scoped, tag = 'input window, operand 1, single buffered']
    #allocation7 [shape = 's32[1]{0}', space=sflag, size = 0x4, scoped, tag = 'scoped memory for tpu_custom_call.1']
    #allocation8 [shape = 'u8[8192]{0}', space=vmem, size = 0x2000, scoped, tag = 'output window, operand 0, single buffered']
    %7 = vsyncpa [#allocation4], 0
    %8 = vsyncpa [#allocation7], 0
    %9 = vsyncpa [#allocation5], 0
    // Predicated region
    $region2: #{tpu_custom_call.1} parent=1 // pred_check
      _
    $region3: #{tpu_custom_call.1} parent=1 // pred_check_branch
      %11 = sbr.rel (0) target = $region5
    $region4: #{tpu_custom_call.1} parent=1 // pred_region
      %s13 = ssub.s32 256, 256
      %14 = vsyncadd [#allocation4], %s13
      %s15 = sshll.u32 [#allocation3], 4
      %s16 = int_to_ptr.vmem [resolvable:$true] %s15
      %21 = dma.hbm_to_vmem [thread:$0]  %s0, 256, %s16, [#allocation4], 128, 128, 8
    $region5: #{tpu_custom_call.1} parent=1 // pred_fallthru
      _
    // Predicated region
    $region6: #{tpu_custom_call.1} parent=1 // pred_check
      _
    $region7: #{tpu_custom_call.1} parent=1 // pred_check_branch
      %23 = sbr.rel (0) target = $region9
    $region8: #{tpu_custom_call.1} parent=1 // pred_region
      %s25 = ssub.s32 512, 512
      %26 = vsyncadd [#allocation7], %s25
      %s27 = sshll.u32 [#allocation6], 4
      %s28 = int_to_ptr.vmem [resolvable:$true] %s27
      %33 = dma.hbm_to_vmem [thread:$0]  %s1, 512, %s28, [#allocation7], 128, 128, 8
    $region9: #{tpu_custom_call.1} parent=1 // pred_fallthru
      _
    // Predicated region
    $region10: #{tpu_custom_call.1} parent=1 // pred_check
      _
    $region11: #{tpu_custom_call.1} parent=1 // pred_check_branch
      %35 = sbr.rel (0) target = $region13
    $region12: #{tpu_custom_call.1} parent=1 // pred_region
      %36 = dma.done [#allocation4], 256
    $region13: #{tpu_custom_call.1} parent=1 // pred_fallthru
      _
    // Predicated region
    $region14: #{tpu_custom_call.1} parent=1 // pred_check
      _
    $region15: #{tpu_custom_call.1} parent=1 // pred_check_branch
      %38 = sbr.rel (0) target = $region17
    $region16: #{tpu_custom_call.1} parent=1 // pred_region
      %39 = dma.done [#allocation7], 512
    $region17: #{tpu_custom_call.1} parent=1 // pred_fallthru
      _
    %p40 = scmp.eq.s32.totalorder 0, 0
    // Predicated region
    $region18: #{tpu_custom_call.1} parent=1 // pred_check
      %p41 = pneg %p40
    $region19: #{tpu_custom_call.1} parent=1 // pred_check_branch
      %43 = sbr.rel (%p41) target = $region21
    $region20: #{tpu_custom_call.1} parent=1 // pred_region
      %vm44 = vcmask 261120
      %45 = vst.msk [vmem:[#allocation2] sm:$0xff] %vm44, 0.0
      %46 = vst.msk [vmem:[#allocation2 + $0x8] sm:$0xff] %vm44, 0.0
    $region21: #{tpu_custom_call.1} parent=1 // pred_fallthru
      _
    %v47 = vld [vmem:[#allocation2] sm:$0xff]
    %v48 = vld [vmem:[#allocation2 + $0x8] sm:$0xff]
    %v49 = vld [vmem:[#allocation3] sm:$0xff]
    %v50 = vld [vmem:[#allocation3 + $0x8] sm:$0xff]
    %v51 = vld [vmem:[#allocation6] sm:$0xff]
    %v52 = vld [vmem:[#allocation6 + $0x8] sm:$0xff]
    %v53 = vld [vmem:[#allocation6 + $0x10] sm:$0xff]
    %v54 = vld [vmem:[#allocation6 + $0x18] sm:$0xff]
    %vm55 = vcmask 261120
    %v57 = vsel %vm55, %v49, 0
    %v60 = vsel %vm55, %v50, 0
    %62 = vmatprep.subr.mxu0 0.0
    %63 = vmatpush1.msra.mxu0 %v51
    %64 = vmatprep.subr.mxu0 0.0
    %65 = vmatpush1.msra.mxu0 %v52
    %66 = vmatprep.subr.mxu0 0.0
    %67 = vmatpush1.msra.mxu0 %v53
    %68 = vmatprep.subr.mxu0 0.0
    %69 = vmatpush1.msra.mxu0 %v54
    %70 = vmatprep.subr.mxu0 0.0
    %71 = vmatpush1.msra.mxu0 0.0
    %72 = vmatprep.subr.mxu0 0.0
    %73 = vmatpush1.msra.mxu0 0.0
    %74 = vmatprep.subr.mxu0 0.0
    %75 = vmatpush1.msra.mxu0 0.0
    %76 = vmatprep.subr.mxu0 0.0
    %77 = vmatpush1.msra.mxu0 0.0
    %78 = vmatprep.subr.mxu0 0.0
    %79 = vmatpush1.msra.mxu0 0.0
    %80 = vmatprep.subr.mxu0 0.0
    %81 = vmatpush1.msra.mxu0 0.0
    %82 = vmatprep.subr.mxu0 0.0
    %83 = vmatpush1.msra.mxu0 0.0
    %84 = vmatprep.subr.mxu0 0.0
    %85 = vmatpush1.msra.mxu0 0.0
    %86 = vmatprep.subr.mxu0 0.0
    %87 = vmatpush1.msra.mxu0 0.0
    %88 = vmatprep.subr.mxu0 0.0
    %89 = vmatpush1.msra.mxu0 0.0
    %90 = vmatprep.subr.mxu0 0.0
    %91 = vmatpush1.msra.mxu0 0.0
    %92 = vmatprep.subr.mxu0 0.0
    %93 = vmatpush1.msra.mxu0 0.0
    %94 = vmatprep.subr.mxu0 0.0
    %95 = vmatpush1.msra.mxu0 0.0
    %96 = vmatprep.subr.mxu0 0.0
    %97 = vmatpush1.msra.mxu0 0.0
    %98 = vmatprep.subr.mxu0 0.0
    %99 = vmatpush1.msra.mxu0 0.0
    %100 = vmatprep.subr.mxu0 0.0
    %101 = vmatpush1.msra.mxu0 0.0
    %102 = vmatprep.subr.mxu0 0.0
    %103 = vmatpush1.msra.mxu0 0.0
    %104 = vmatprep.subr.mxu0 0.0
    %105 = vmatpush1.msra.mxu0 0.0
    %106 = vmatprep.subr.mxu0 0.0
    %107 = vmatpush1.msra.mxu0 0.0
    %108 = vmatprep.subr.mxu0 0.0
    %109 = vmatpush1.msra.mxu0 0.0
    %110 = vmatprep.subr.mxu0 0.0
    %111 = vmatpush1.msra.mxu0 0.0
    %112 = vmatprep.subr.mxu0 0.0
    %113 = vmatpush1.msra.mxu0 0.0
    %114 = vmatprep.subr.mxu0 0.0
    %115 = vmatpush1.msra.mxu0 0.0
    %116 = vmatprep.subr.mxu0 0.0
    %117 = vmatpush1.msra.mxu0 0.0
    %118 = vmatprep.subr.mxu0 0.0
    %119 = vmatpush1.msra.mxu0 0.0
    %120 = vmatprep.subr.mxu0 0.0
    %121 = vmatpush1.msra.mxu0 0.0
    %122 = vmatprep.subr.mxu0 0.0
    %123 = vmatpush1.msra.mxu0 0.0
    %124 = vmatprep.subr.mxu0 0.0
    %125 = vmatpush1.msra.mxu0 0.0
    %126 = vmatprep.mubr.f32.mxu0 0.0
    %127 = vmatmul.mubr.f32.gmra.mrb[0].mxu0 %v57
    %v128 = vpop.f32.mrb[0].mxu0
    %v129 = vadd.f32 0.0, %v128
    %v130 = vpop.f32.mrb[0].mxu0
    %131 = vmatprep.mubr.f32.mxu0 0.0
    %132 = vmatmul.mubr.f32.gmra.mrb[0].mxu0 %v60
    %v133 = vpop.f32.mrb[0].mxu0
    %v134 = vadd.f32 0.0, %v133
    %v135 = vpop.f32.mrb[0].mxu0
    %136 = vdwg.mxu0
    %v137 = vadd.f32 %v47, %v129
    %v138 = vadd.f32 %v48, %v134
    %139 = vst.msk [vmem:[#allocation2] sm:$0xff] %vm55, %v137
    %140 = vst.msk [vmem:[#allocation2 + $0x8] sm:$0xff] %vm55, %v138
    // Predicated region
    $region22: #{tpu_custom_call.1} parent=1 // pred_check
      %p141 = pneg %p40
    $region23: #{tpu_custom_call.1} parent=1 // pred_check_branch
      %143 = sbr.rel (%p141) target = $region25
    $region24: #{tpu_custom_call.1} parent=1 // pred_region
      %v144 = vld [vmem:[#allocation2] sm:$0xff]
      %v145 = vld [vmem:[#allocation2 + $0x8] sm:$0xff]
      %146 = vst.msk [vmem:[#allocation8] sm:$0xff] %vm55, %v144
      %147 = vst.msk [vmem:[#allocation8 + $0x8] sm:$0xff] %vm55, %v145
    $region25: #{tpu_custom_call.1} parent=1 // pred_fallthru
      _
    // Predicated region
    $region26: #{tpu_custom_call.1} parent=1 // pred_check
      _
    $region27: #{tpu_custom_call.1} parent=1 // pred_check_branch
      %149 = sbr.rel (0) target = $region29
    $region28: #{tpu_custom_call.1} parent=1 // pred_region
      %s151 = ssub.s32 256, 256
      %152 = vsyncadd [#allocation5], %s151
      %s153 = sshll.u32 [#allocation8], 4
      %s154 = int_to_ptr.vmem [resolvable:$true] %s153
      %159 = dma.vmem_to_hbm [thread:$0]  %s154, 256, %s2, [#allocation5], 128, 128, 8
    $region29: #{tpu_custom_call.1} parent=1 // pred_fallthru
      _
    // Predicated region
    $region30: #{tpu_custom_call.1} parent=1 // pred_check
      _
    $region31: #{tpu_custom_call.1} parent=1 // pred_check_branch
      %161 = sbr.rel (0) target = $region33
    $region32: #{tpu_custom_call.1} parent=1 // pred_region
      %162 = dma.done [#allocation5], 256
    $region33: #{tpu_custom_call.1} parent=1 // pred_fallthru
      _
    %163 = vsyncpa [#allocation4], 1
    %164 = vsyncpa [#allocation7], 1
    %165 = vsyncpa [#allocation5], 1

</llo_original>
